<compile_context>
chip_gen: v7x
topology: tpu7x:2x2x1
jax: 0.10.0
libtpu: 0.0.40
codegen_flags: <defaults>
</compile_context>

<pallas_src>
import functools

import jax
import jax.numpy as jnp
from jax.experimental import pallas as pl
from jax.experimental.pallas import tpu as pltpu


def _round_up(x: int, m: int) -> int:
    return (x + m - 1) // m * m


def _pick_batch_tile(B: int) -> int:
    """Batch row-tile: multiple of 8, >=4 grid steps for big batches, <=1024."""
    if B <= 32:
        return _round_up(B, 8)
    tb = _round_up(-(-B // 4), 8)      # cdiv(B, 4) -> >= 4 grid steps
    return min(tb, 1024)


def qnet_kernel(x_ref, w1_ref, b1_ref, w2_ref, b2_ref, o_ref):
    # fc1: x @ W1 on the MXU (bf16 operands, f32 accumulation), bias + ReLU
    # in f32 (v5e VPU has no bf16).
    h = jnp.dot(x_ref[...], w1_ref[...], preferred_element_type=jnp.float32)
    h = jnp.maximum(h + b1_ref[...], 0.0)               # [TB, Hp] + [1, Hp]
    # fc2: cast activations back to the weight dtype so the second matmul is
    # also a native bf16 MXU pass; accumulate f32, add bias in f32.
    out = jnp.dot(h.astype(w2_ref.dtype), w2_ref[...],
                  preferred_element_type=jnp.float32)
    o_ref[...] = (out + b2_ref[...]).astype(o_ref.dtype)  # lane-dense store


def prepare_qnet_params(w1, b1, w2, b2, *, compute_dtype=jnp.bfloat16):
    """One-time lane-dense padding of H/A plus bf16 cast of the MXU weights.

    Weights are [in, out] (transpose of PyTorch nn.Linear), biases [1, out].
    Zero padding is numerically inert through ReLU / matmul / bias-add.
    """
    obs_dim, hidden_dim = w1.shape
    action_dim = w2.shape[1]
    H_pad = _round_up(hidden_dim, 128)
    A_pad = _round_up(action_dim, 128)
    w1p = jnp.pad(w1, ((0, 0), (0, H_pad - hidden_dim))).astype(compute_dtype)
    b1p = jnp.pad(b1, ((0, 0), (0, H_pad - hidden_dim))).astype(jnp.float32)
    w2p = jnp.pad(w2, ((0, H_pad - hidden_dim),
                       (0, A_pad - action_dim))).astype(compute_dtype)
    b2p = jnp.pad(b2, ((0, 0), (0, A_pad - action_dim))).astype(jnp.float32)
    return (w1p, b1p, w2p, b2p), action_dim


@functools.partial(jax.jit, static_argnames=("action_dim",))
def qnet_forward(x, w1p, b1p, w2p, b2p, *, action_dim):
    """x: [B, obs_dim] f32 -> [B, action_dim] f32.

    Takes the pre-padded / pre-cast params from prepare_qnet_params.
    """
    B, obs_dim = x.shape
    H_pad = w1p.shape[1]
    A_pad = w2p.shape[1]

    TB = _pick_batch_tile(B)
    B_pad = _round_up(B, TB)

    # Pad the batch to whole tiles and move the MXU operand to bf16 so the
    # first dot is a native (not mixed-precision) matmul.
    xp = jnp.pad(x, ((0, B_pad - B), (0, 0))).astype(w1p.dtype)

    grid = (B_pad // TB,)
    flops = 2 * B_pad * (obs_dim * H_pad + H_pad * A_pad)
    bytes_accessed = (
        xp.dtype.itemsize * B_pad * obs_dim
        + w1p.size * w1p.dtype.itemsize + b1p.size * 4
        + w2p.size * w2p.dtype.itemsize + b2p.size * 4
        + 4 * B_pad * A_pad)                       # padded f32 output writeback

    out_padded = pl.pallas_call(
        qnet_kernel,
        out_shape=jax.ShapeDtypeStruct((B_pad, A_pad), jnp.float32),
        grid=grid,
        in_specs=[
            # Batch-tiled activations: one row tile per grid step.
            pl.BlockSpec((TB, obs_dim), lambda i: (i, 0)),
            # Weights / biases: full blocks, grid-invariant index_map -> stay
            # VMEM-resident across the whole grid.  (pipeline_mode=Buffered(1)
            # would shave ~70 KiB of double-buffering; omitted -- footprint is
            # tiny and the default pipelining path is the well-tested one.)
            pl.BlockSpec((obs_dim, H_pad), lambda i: (0, 0)),
            pl.BlockSpec((1, H_pad), lambda i: (0, 0)),
            pl.BlockSpec((H_pad, A_pad), lambda i: (0, 0)),
            pl.BlockSpec((1, A_pad), lambda i: (0, 0)),
        ],
        out_specs=pl.BlockSpec((TB, A_pad), lambda i: (i, 0)),
        compiler_params=pltpu.CompilerParams(
            dimension_semantics=("parallel",)),
        cost_estimate=pl.CostEstimate(
            flops=flops, transcendentals=0, bytes_accessed=bytes_accessed),
    )(xp, w1p, b1p, w2p, b2p)

    # Strip batch / lane padding (fused into the same executable by jit).
    return out_padded[:B, :action_dim]


def init_qnet_params(key, obs_dim, hidden_dim, action_dim):
    """nn.Linear-style uniform(-1/sqrt(fan_in), +1/sqrt(fan_in)) init,
    stored as [in, out] weights and [1, out] biases."""
    k1, k2, k3, k4 = jax.random.split(key, 4)
    bound1 = 1.0 / jnp.sqrt(obs_dim)
    bound2 = 1.0 / jnp.sqrt(hidden_dim)
    w1 = jax.random.uniform(k1, (obs_dim, hidden_dim), jnp.float32,
                            -bound1, bound1)
    b1 = jax.random.uniform(k2, (1, hidden_dim), jnp.float32, -bound1, bound1)
    w2 = jax.random.uniform(k3, (hidden_dim, action_dim), jnp.float32,
                            -bound2, bound2)
    b2 = jax.random.uniform(k4, (1, action_dim), jnp.float32, -bound2, bound2)
    return w1, b1, w2, b2


if __name__ == "__main__":
    # Q-network shapes: obs_dim=4 (CartPole-like), hidden_dim=32,
    # action_dim=2, batch=2.
    B, obs_dim, hidden_dim, action_dim = 2, 4, 32, 2

    key = jax.random.PRNGKey(0)
    kx, kp = jax.random.split(key)
    x = jax.random.normal(kx, (B, obs_dim), jnp.float32)
    w1, b1, w2, b2 = init_qnet_params(kp, obs_dim, hidden_dim, action_dim)

    # One-time parameter prep (padding + bf16 cast) -- not paid per step.
    (w1p, b1p, w2p, b2p), act_dim = prepare_qnet_params(w1, b1, w2, b2)

    out = qnet_forward(x, w1p, b1p, w2p, b2p, action_dim=act_dim)
    jax.block_until_ready(out)

    # Pure-JAX f32 reference (bf16 MXU operands -> loose tolerance).
    ref = jnp.maximum(x @ w1 + b1, 0.0) @ w2 + b2
    assert out.shape == (B, action_dim)
    assert jnp.allclose(out, ref, atol=5e-2, rtol=5e-2)

    # Training-sized batch -> multi-step grid (4 tiles of 128 rows) to
    # exercise megacore sharding + pipelining.
    xb = jax.random.normal(kx, (512, obs_dim), jnp.float32)
    outb = qnet_forward(xb, w1p, b1p, w2p, b2p, action_dim=act_dim)
    jax.block_until_ready(outb)
    refb = jnp.maximum(xb @ w1 + b1, 0.0) @ w2 + b2
    assert outb.shape == (512, action_dim)
    assert jnp.allclose(outb, refb, atol=5e-2, rtol=5e-2)

    print("KERNEL_OK")
</pallas_src>

<mosaic_0001>
module attributes {stable_mosaic.version = 11 : i64} {
  func.func @qnet_kernel(%arg0: i32, %arg1: memref<8x4xbf16, #tpu.memory_space<vmem>>, %arg2: memref<4x128xbf16, #tpu.memory_space<vmem>>, %arg3: memref<1x128xf32, #tpu.memory_space<vmem>>, %arg4: memref<128x128xbf16, #tpu.memory_space<vmem>>, %arg5: memref<1x128xf32, #tpu.memory_space<vmem>>, %arg6: memref<8x128xf32, #tpu.memory_space<vmem>>) attributes {dimension_semantics = [#tpu.dimension_semantics<parallel>], iteration_bounds = array<i64: 1>, scalar_prefetch = 0 : i64, scratch_operands = 0 : i64, tpu.core_type = #tpu.core_type<tc>, window_params = [{transform_indices = @transform_0, window_bounds = array<i64: 8, 4>}, {pipeline_mode = #tpu.pipeline_mode<synchronous>, transform_indices = @transform_1, window_bounds = array<i64: 4, 128>}, {pipeline_mode = #tpu.pipeline_mode<synchronous>, transform_indices = @transform_2, window_bounds = array<i64: 1, 128>}, {pipeline_mode = #tpu.pipeline_mode<synchronous>, transform_indices = @transform_3, window_bounds = array<i64: 128, 128>}, {pipeline_mode = #tpu.pipeline_mode<synchronous>, transform_indices = @transform_4, window_bounds = array<i64: 1, 128>}, {transform_indices = @transform_5, window_bounds = array<i64: 8, 128>}]} {
    %c0 = arith.constant 0 : index
    %c0_0 = arith.constant 0 : index
    %0 = vector.load %arg1[%c0, %c0_0] : memref<8x4xbf16, #tpu.memory_space<vmem>>, vector<8x4xbf16>
    %c0_1 = arith.constant 0 : index
    %c0_2 = arith.constant 0 : index
    %1 = vector.load %arg2[%c0_1, %c0_2] : memref<4x128xbf16, #tpu.memory_space<vmem>>, vector<4x128xbf16>
    %cst = arith.constant dense<0.000000e+00> : vector<8x128xf32>
    %2 = tpu.matmul %0, %1, %cst {dimension_numbers = #tpu.dot_dimension_numbers<[1], [0], [0], [1], [0, 0, 1, 1], [], []>} : vector<8x4xbf16>, vector<4x128xbf16>, vector<8x128xf32> -> vector<8x128xf32>
    %c0_3 = arith.constant 0 : index
    %c0_4 = arith.constant 0 : index
    %3 = vector.load %arg3[%c0_3, %c0_4] : memref<1x128xf32, #tpu.memory_space<vmem>>, vector<1x128xf32>
    %4 = vector.broadcast %3 : vector<1x128xf32> to vector<8x128xf32>
    %5 = arith.addf %2, %4 : vector<8x128xf32>
    %cst_5 = arith.constant 0.000000e+00 : f32
    %6 = vector.broadcast %cst_5 : f32 to vector<8x128xf32>
    %7 = arith.maximumf %5, %6 : vector<8x128xf32>
    %8 = arith.truncf %7 : vector<8x128xf32> to vector<8x128xbf16>
    %c0_6 = arith.constant 0 : index
    %c0_7 = arith.constant 0 : index
    %9 = vector.load %arg4[%c0_6, %c0_7] : memref<128x128xbf16, #tpu.memory_space<vmem>>, vector<128x128xbf16>
    %cst_8 = arith.constant dense<0.000000e+00> : vector<8x128xf32>
    %10 = tpu.matmul %8, %9, %cst_8 {dimension_numbers = #tpu.dot_dimension_numbers<[1], [0], [0], [1], [0, 0, 1, 1], [], []>} : vector<8x128xbf16>, vector<128x128xbf16>, vector<8x128xf32> -> vector<8x128xf32>
    %c0_9 = arith.constant 0 : index
    %c0_10 = arith.constant 0 : index
    %11 = vector.load %arg5[%c0_9, %c0_10] : memref<1x128xf32, #tpu.memory_space<vmem>>, vector<1x128xf32>
    %12 = vector.broadcast %11 : vector<1x128xf32> to vector<8x128xf32>
    %13 = arith.addf %10, %12 : vector<8x128xf32>
    %c0_11 = arith.constant 0 : index
    %c0_12 = arith.constant 0 : index
    %14 = vector.load %arg6[%c0_11, %c0_12] : memref<8x128xf32, #tpu.memory_space<vmem>>, vector<8x128xf32>
    tpu.vector_store %arg6[%c0_11, %c0_12], %13 {strides = array<i32>} : memref<8x128xf32, #tpu.memory_space<vmem>>, vector<8x128xf32>,
    return
  }
  func.func @transform_0(%arg0: i32) -> (i32, i32) {
    %c0_i32 = arith.constant 0 : i32
    %c0_i32_0 = arith.constant 0 : i32
    return %arg0, %c0_i32 : i32, i32
  }
  func.func @transform_1(%arg0: i32) -> (i32, i32) {
    %c0_i32 = arith.constant 0 : i32
    %c0_i32_0 = arith.constant 0 : i32
    %c0_i32_1 = arith.constant 0 : i32
    return %c0_i32, %c0_i32_0 : i32, i32
  }
  func.func @transform_2(%arg0: i32) -> (i32, i32) {
    %c0_i32 = arith.constant 0 : i32
    %c0_i32_0 = arith.constant 0 : i32
    %c0_i32_1 = arith.constant 0 : i32
    return %c0_i32, %c0_i32_0 : i32, i32
  }
  func.func @transform_3(%arg0: i32) -> (i32, i32) {
    %c0_i32 = arith.constant 0 : i32
    %c0_i32_0 = arith.constant 0 : i32
    %c0_i32_1 = arith.constant 0 : i32
    return %c0_i32, %c0_i32_0 : i32, i32
  }
  func.func @transform_4(%arg0: i32) -> (i32, i32) {
    %c0_i32 = arith.constant 0 : i32
    %c0_i32_0 = arith.constant 0 : i32
    %c0_i32_1 = arith.constant 0 : i32
    return %c0_i32, %c0_i32_0 : i32, i32
  }
  func.func @transform_5(%arg0: i32) -> (i32, i32) {
    %c0_i32 = arith.constant 0 : i32
    %c0_i32_0 = arith.constant 0 : i32
    return %arg0, %c0_i32 : i32, i32
  }
}

</mosaic_0001>

<llo_original>
// kernel: qnet_forward.1
$region0: #{qnet_forward.1}
  #allocation0 [shape = 'u32[]', space=smem, size = 0x4, offset = 0x4, fixed_abs, tag = 'smem constant byte address 0x4 - core index']
  #allocation1 [shape = 'u32[144,128]{1,0:T(1,128)}', space=vmem, size = 0x12000, scoped, tag = 'internal scratch']
  %s0 = inlined_call_operand.vmem [shape: bf16[8,4], index: 0, kind: input, shape index: {}]
  %s1 = inlined_call_operand.vmem [shape: bf16[4,128], index: 1, kind: input, shape index: {}]
  %s2 = inlined_call_operand.vmem [shape: f32[1,128], index: 2, kind: input, shape index: {}]
  %s3 = inlined_call_operand.hbm [shape: bf16[128,128], index: 3, kind: input, shape index: {}]
  %s4 = inlined_call_operand.vmem [shape: f32[1,128], index: 4, kind: input, shape index: {}]
  %s5 = inlined_call_operand.vmem [shape: f32[8,128], index: 5, kind: output, shape index: {}]
  %s6 = sld [smem:[#allocation0]]
  $region34: #{qnet_forward.1} parent=0
    _
  %s8 = ssub.s32 1, %s6
  %s9 = scalar_select 0, %s8, %s6
  $region1: #{qnet_forward.1} parent=0
    #allocation2 [shape = 'u8[32768]{0}', space=vmem, size = 0x8000, scoped, tag = 'input window, operand 3, single buffered']
    #allocation3 [shape = 's32[1]{0}', space=sflag, size = 0x4, scoped, tag = 'scoped memory for qnet_forward.1']
    %10 = vsyncpa [#allocation3], 0
    // Predicated region
    $region2: #{qnet_forward.1} parent=1 // pred_check
      _
    $region3: #{qnet_forward.1} parent=1 // pred_check_branch
      %12 = sbr.rel (0) target = $region5
    $region4: #{qnet_forward.1} parent=1 // pred_region
      _
    $region5: #{qnet_forward.1} parent=1 // pred_fallthru
      _
    // Predicated region
    $region6: #{qnet_forward.1} parent=1 // pred_check
      _
    $region7: #{qnet_forward.1} parent=1 // pred_check_branch
      %14 = sbr.rel (0) target = $region9
    $region8: #{qnet_forward.1} parent=1 // pred_region
      _
    $region9: #{qnet_forward.1} parent=1 // pred_fallthru
      _
    // Predicated region
    $region10: #{qnet_forward.1} parent=1 // pred_check
      _
    $region11: #{qnet_forward.1} parent=1 // pred_check_branch
      %16 = sbr.rel (0) target = $region13
    $region12: #{qnet_forward.1} parent=1 // pred_region
      _
    $region13: #{qnet_forward.1} parent=1 // pred_fallthru
      _
    // Predicated region
    $region14: #{qnet_forward.1} parent=1 // pred_check
      _
    $region15: #{qnet_forward.1} parent=1 // pred_check_branch
      %18 = sbr.rel (0) target = $region17
    $region16: #{qnet_forward.1} parent=1 // pred_region
      %s20 = ssub.s32 1024, 1024
      %21 = vsyncadd [#allocation3], %s20
      %s22 = sshll.u32 [#allocation2], 4
      %s23 = int_to_ptr.vmem [resolvable:$true] %s22
      %28 = dma.hbm_to_vmem [thread:$0]  %s3, 1024, %s23, [#allocation3], 64, 64, 4
    $region17: #{qnet_forward.1} parent=1 // pred_fallthru
      _
    // Predicated region
    $region18: #{qnet_forward.1} parent=1 // pred_check
      _
    $region19: #{qnet_forward.1} parent=1 // pred_check_branch
      %30 = sbr.rel (0) target = $region21
    $region20: #{qnet_forward.1} parent=1 // pred_region
      _
    $region21: #{qnet_forward.1} parent=1 // pred_fallthru
      _
    // Predicated region
    $region22: #{qnet_forward.1} parent=1 // pred_check
      _
    $region23: #{qnet_forward.1} parent=1 // pred_check_branch
      %32 = sbr.rel (0) target = $region25
    $region24: #{qnet_forward.1} parent=1 // pred_region
      %33 = dma.done [#allocation3], 1024
    $region25: #{qnet_forward.1} parent=1 // pred_fallthru
      _
    %v35 = vld [vmem:[%s0] sm:$0xf]
    %v36 = vld [vmem:[%s1] sm:$0x3]
    %v37 = vld [vmem:[%s2] sm:$0x1]
    %v39 = vlaneseq
    %v40 = vshrl.u32 %v39, 7
    %v41 = vsub.s32 0, %v40
    %v42 = vrot.slane %v37, %v41
    %vm44 = vcmask 31744
    %v46 = vsel %vm44, %v35, 0
    %vm48 = vcmask 1041408
    %v50 = vsel %vm48, %v36, 0
    %52 = vmatprep.subr.bf16.mxu0 0
    %53 = vmatpush1.bf16.msra.mxu0 %v50
    %54 = vmatprep.subr.bf16.mxu0 0
    %55 = vmatpush1.bf16.msra.mxu0 0
    %56 = vmatprep.subr.bf16.mxu0 0
    %57 = vmatpush1.bf16.msra.mxu0 0
    %58 = vmatprep.subr.bf16.mxu0 0
    %59 = vmatpush1.bf16.msra.mxu0 0
    %60 = vmatprep.subr.bf16.mxu0 0
    %61 = vmatpush1.bf16.msra.mxu0 0
    %62 = vmatprep.subr.bf16.mxu0 0
    %63 = vmatpush1.bf16.msra.mxu0 0
    %64 = vmatprep.subr.bf16.mxu0 0
    %65 = vmatpush1.bf16.msra.mxu0 0
    %66 = vmatprep.subr.bf16.mxu0 0
    %67 = vmatpush1.bf16.msra.mxu0 0
    %68 = vmatprep.subr.bf16.mxu0 0
    %69 = vmatpush1.bf16.msra.mxu0 0
    %70 = vmatprep.subr.bf16.mxu0 0
    %71 = vmatpush1.bf16.msra.mxu0 0
    %72 = vmatprep.subr.bf16.mxu0 0
    %73 = vmatpush1.bf16.msra.mxu0 0
    %74 = vmatprep.subr.bf16.mxu0 0
    %75 = vmatpush1.bf16.msra.mxu0 0
    %76 = vmatprep.subr.bf16.mxu0 0
    %77 = vmatpush1.bf16.msra.mxu0 0
    %78 = vmatprep.subr.bf16.mxu0 0
    %79 = vmatpush1.bf16.msra.mxu0 0
    %80 = vmatprep.subr.bf16.mxu0 0
    %81 = vmatpush1.bf16.msra.mxu0 0
    %82 = vmatprep.subr.bf16.mxu0 0
    %83 = vmatpush1.bf16.msra.mxu0 0
    %84 = vmatprep.mubr.bf16.mxu0 0
    %85 = vmatmul.mubr.bf16.gmra.mrb[0].mxu0 %v46
    %v86 = vpop.f32.mrb[0].mxu0
    %v87 = vadd.f32 %v42, %v86
    %v88 = vpop.f32.mrb[0].mxu0
    %v89 = vpop.f32.mrb[0].mxu0
    %v90 = vpop.f32.mrb[0].mxu0
    %91 = vdwg.mxu0
    %v92 = vmax.f32 %v87, 0.0
    %v93 = vpack.c.bf16 %v92, %v92
    %v94 = vld [vmem:[#allocation2] sm:$0xf]
    %v95 = vld [vmem:[#allocation2 + $0x4] sm:$0xf]
    %v96 = vld [vmem:[#allocation2 + $0x8] sm:$0xf]
    %v97 = vld [vmem:[#allocation2 + $0xc] sm:$0xf]
    %v98 = vld [vmem:[#allocation2 + $0x10] sm:$0xf]
    %v99 = vld [vmem:[#allocation2 + $0x14] sm:$0xf]
    %v100 = vld [vmem:[#allocation2 + $0x18] sm:$0xf]
    %v101 = vld [vmem:[#allocation2 + $0x1c] sm:$0xf]
    %v102 = vld [vmem:[#allocation2 + $0x20] sm:$0xf]
    %v103 = vld [vmem:[#allocation2 + $0x24] sm:$0xf]
    %v104 = vld [vmem:[#allocation2 + $0x28] sm:$0xf]
    %v105 = vld [vmem:[#allocation2 + $0x2c] sm:$0xf]
    %v106 = vld [vmem:[#allocation2 + $0x30] sm:$0xf]
    %v107 = vld [vmem:[#allocation2 + $0x34] sm:$0xf]
    %v108 = vld [vmem:[#allocation2 + $0x38] sm:$0xf]
    %v109 = vld [vmem:[#allocation2 + $0x3c] sm:$0xf]
    %v110 = vld [vmem:[%s4] sm:$0x1]
    %v112 = vlaneseq
    %v113 = vshrl.u32 %v112, 7
    %v114 = vsub.s32 0, %v113
    %v115 = vrot.slane %v110, %v114
    %v133 = vunpack.c.l.b16 %v94
    %v134 = vunpack.c.l.b16 %v95
    %v135 = vunpack.c.l.b16 %v96
    %v136 = vunpack.c.l.b16 %v97
    %v137 = vunpack.c.l.b16 %v98
    %v138 = vunpack.c.l.b16 %v99
    %v139 = vunpack.c.l.b16 %v100
    %v140 = vunpack.c.l.b16 %v101
    %v141 = vunpack.c.l.b16 %v102
    %v142 = vunpack.c.l.b16 %v103
    %v143 = vunpack.c.l.b16 %v104
    %v144 = vunpack.c.l.b16 %v105
    %v145 = vunpack.c.l.b16 %v106
    %v146 = vunpack.c.l.b16 %v107
    %v147 = vunpack.c.l.b16 %v108
    %v148 = vunpack.c.l.b16 %v109
    %v149 = vpack.c.b16 %v134, %v133
    %v150 = vpack.c.b16 %v136, %v135
    %v151 = vpack.c.b16 %v138, %v137
    %v152 = vpack.c.b16 %v140, %v139
    %v153 = vpack.c.b16 %v142, %v141
    %v154 = vpack.c.b16 %v144, %v143
    %v155 = vpack.c.b16 %v146, %v145
    %v156 = vpack.c.b16 %v148, %v147
    %165 = vmatprep.subr.bf16.mxu0 0
    %166 = vmatpush1.bf16.msra.mxu0 %v149
    %167 = vmatprep.subr.bf16.mxu0 0
    %168 = vmatpush1.bf16.msra.mxu0 %v150
    %169 = vmatprep.subr.bf16.mxu0 0
    %170 = vmatpush1.bf16.msra.mxu0 %v151
    %171 = vmatprep.subr.bf16.mxu0 0
    %172 = vmatpush1.bf16.msra.mxu0 %v152
    %173 = vmatprep.subr.bf16.mxu0 0
    %174 = vmatpush1.bf16.msra.mxu0 %v153
    %175 = vmatprep.subr.bf16.mxu0 0
    %176 = vmatpush1.bf16.msra.mxu0 %v154
    %177 = vmatprep.subr.bf16.mxu0 0
    %178 = vmatpush1.bf16.msra.mxu0 %v155
    %179 = vmatprep.subr.bf16.mxu0 0
    %180 = vmatpush1.bf16.msra.mxu0 %v156
    %181 = vmatprep.subr.bf16.mxu0 0
    %182 = vmatpush1.bf16.msra.mxu0 0
    %183 = vmatprep.subr.bf16.mxu0 0
    %184 = vmatpush1.bf16.msra.mxu0 0
    %185 = vmatprep.subr.bf16.mxu0 0
    %186 = vmatpush1.bf16.msra.mxu0 0
    %187 = vmatprep.subr.bf16.mxu0 0
    %188 = vmatpush1.bf16.msra.mxu0 0
    %189 = vmatprep.subr.bf16.mxu0 0
    %190 = vmatpush1.bf16.msra.mxu0 0
    %191 = vmatprep.subr.bf16.mxu0 0
    %192 = vmatpush1.bf16.msra.mxu0 0
    %193 = vmatprep.subr.bf16.mxu0 0
    %194 = vmatpush1.bf16.msra.mxu0 0
    %195 = vmatprep.subr.bf16.mxu0 0
    %196 = vmatpush1.bf16.msra.mxu0 0
    %197 = vmatprep.mubr.bf16.mxu0 0
    %198 = vmatmul.mubr.bf16.gmra.mrb[0].mxu0 %v93
    %v199 = vpop.f32.mrb[0].mxu0
    %v200 = vadd.f32 %v115, %v199
    %v201 = vpop.f32.mrb[0].mxu0
    %v202 = vpop.f32.mrb[0].mxu0
    %v203 = vpop.f32.mrb[0].mxu0
    %204 = vdwg.mxu0
    %205 = vst [vmem:[%s5] sm:$0xff] %v200
    // Predicated region
    $region26: #{qnet_forward.1} parent=1 // pred_check
      _
    $region27: #{qnet_forward.1} parent=1 // pred_check_branch
      %207 = sbr.rel (0) target = $region29
    $region28: #{qnet_forward.1} parent=1 // pred_region
      _
    $region29: #{qnet_forward.1} parent=1 // pred_fallthru
      _
    // Predicated region
    $region30: #{qnet_forward.1} parent=1 // pred_check
      _
    $region31: #{qnet_forward.1} parent=1 // pred_check_branch
      %209 = sbr.rel (0) target = $region33
    $region32: #{qnet_forward.1} parent=1 // pred_region
      _
    $region33: #{qnet_forward.1} parent=1 // pred_fallthru
      _
    %210 = vsyncpa [#allocation3], 1

</llo_original>
